<compile_context>
chip_gen: v6e
topology: v6e:2x2x1
jax: 0.10.0
libtpu: 0.0.40
codegen_flags: <defaults>
</compile_context>

<pallas_src>
import jax
import jax.numpy as jnp
from jax.experimental import pallas as pl
from jax.experimental.pallas import tpu as pltpu


def anfis_kernel(xT_ref, inv_a_ref, neg_b_ref, c_ref, w1t_ref, b1_ref, w2_ref,
                 b2_ref, out_ref):
    # xT_ref:   (2*F, Bt)    batch tile; row h*F + f = feature f of batch half h
    # inv_a/c:  (2*F, M, 1)  Bell MF params tiled for both halves (1/a, c)
    # neg_b:    (2*F*M, 1)   -b, rows ordered h*F*M + f*M + m (matches mf rows)
    # w1t_ref:  (H, F*M)     first Linear transposed (cols indexed f*M + m)
    # b1/w2:    (H, 1)       b2: (1, 1)
    # out_ref:  (2, Bt)      row h = predictions for batch half h
    TWO_F, M, _ = c_ref.shape
    H, FM = w1t_ref.shape

    # ---- Bell MF on one dense (2*F*M, Bt) block -----------------------------
    # The M-fold replication of x happens here (lane-broadcast against (M, 1)
    # params), so the streamed HBM read of x stays 1x.
    z_blocks = []
    for r in range(TWO_F):                         # static unroll, 2*F is tiny
        xf = xT_ref[pl.ds(r, 1), :]                # (1, Bt)
        z_blocks.append(jnp.abs((xf - c_ref[r]) * inv_a_ref[r]))    # (M, Bt)
    z = jnp.concatenate(z_blocks, axis=0)          # (2*F*M, Bt), vreg-dense
    # 1/(1 + z**(2b)) == sigmoid(-2b*log z) == 0.5*(1 + tanh(-b*log z)):
    # log + tanh = 2 EUP pushes/elem, saturating, no overflow, no approx recip.
    # The tiny clamp only keeps +/-inf out of the EUP (x == c / padding lanes);
    # it does not change the value (tanh saturates to exactly 1).
    z = jnp.maximum(z, 1e-30)
    mf = 0.5 * (1.0 + jnp.tanh(neg_b_ref[...] * jnp.log(z)))        # (2FM, Bt)

    # ---- "rules" MLP: Linear(F*M -> H) + ReLU + Linear(H -> 1) --------------
    w1t = w1t_ref[...]
    b1 = b1_ref[...]
    w2 = w2_ref[...]
    b2 = b2_ref[...]
    ys = []
    for half in range(2):                          # one K=F*M MXU matmul / half
        mf_h = mf[half * FM:(half + 1) * FM, :]    # sublane-aligned static slice
        hid = jnp.maximum(
            jnp.dot(w1t, mf_h, preferred_element_type=jnp.float32) + b1, 0.0)
        # out_features == 1: VPU multiply + sublane reduce -> lane-dense (1,Bt),
        # avoids a degenerate N=1 MXU call and masked partial stores.
        ys.append(jnp.sum(hid * w2, axis=0, keepdims=True) + b2)    # (1, Bt)
    out_ref[...] = jnp.concatenate(ys, axis=0)                      # (2, Bt)


def _round_up(n, m):
    return ((n + m - 1) // m) * m


def simple_anfis_forward(x, params, *, block_b=16384):
    """x: (B, F) float32 -> (B, 1) float32.

    Each grid step processes 2*block_b batch elements (the two batch halves
    are packed on the sublane axis of the streamed x operand).
    """
    B, F = x.shape
    a, b, c, w1, b1, w2, b2 = params
    M = a.shape[1]
    H = w1.shape[1]
    FM = F * M

    # Tile size: big enough to amortize the ~0.35 us per-step overhead, capped
    # so (a) large inputs keep >= 2 grid steps (v7x has 2 TensorCores and the
    # grid axis is "parallel") and (b) it never exceeds what the batch needs.
    quarter = _round_up(max(pl.cdiv(B, 4), 1), 128)
    block_b = min(_round_up(max(block_b, 128), 128), quarter)
    Bp2 = _round_up(max(pl.cdiv(B, 2), 1), block_b)      # padded half-batch
    Bp = 2 * Bp2

    # Rough per-step VMEM budget: double-buffered x/out tiles + the dense
    # (2*F*M, block_b) MF intermediates.  Keep well under the 32 MiB scoped
    # default so the same tiling also fits v7x's smaller 64 MiB physical VMEM.
    vmem_est = 4 * block_b * (2 * 2 * F + 2 * 2 + 6 * 2 * FM)
    assert vmem_est < (28 << 20), (
        f"block_b={block_b} needs ~{vmem_est >> 20} MiB VMEM; lower block_b")

    # Pack x transposed with the two batch halves stacked on the sublane axis:
    # (B, F) -> (2*F, Bp2); the streamed operand is sublane-dense for F=4.
    # Padding is skipped entirely when B is already aligned.
    # TODO(synk): accept a pre-transposed/packed x from the producer to skip
    # this extra XLA pass over x.
    pad = Bp - B
    xp = x if pad == 0 else jnp.pad(x, ((0, pad), (0, 0)))
    xT = jnp.transpose(xp.reshape(2, Bp2, F), (0, 2, 1)).reshape(2 * F, Bp2)

    # Tiny wrapper-side parameter prep (O(F*M*H) work, independent of B).
    inv_a = jnp.tile((1.0 / a).reshape(F, M, 1), (2, 1, 1))         # (2F, M, 1)
    c3 = jnp.tile(c.reshape(F, M, 1), (2, 1, 1))                    # (2F, M, 1)
    neg_b = jnp.tile((-b).reshape(FM, 1), (2, 1))                   # (2FM, 1)
    # w1 rows are indexed f*M + m (matches PyTorch's mf.reshape(B, -1)).
    w1t = w1.T                                                      # (H, FM)
    b1c = b1.reshape(H, 1)
    w2c = w2.reshape(H, 1)
    b2c = b2.reshape(1, 1)

    grid = (Bp2 // block_b,)
    p3 = lambda i: (0, 0, 0)
    p2 = lambda i: (0, 0)

    out = pl.pallas_call(
        anfis_kernel,
        out_shape=jax.ShapeDtypeStruct((2, Bp2), jnp.float32),
        grid=grid,
        in_specs=[
            pl.BlockSpec((2 * F, block_b), lambda i: (0, i)),   # streamed x tile
            pl.BlockSpec((2 * F, M, 1), p3),                    # resident params
            pl.BlockSpec((2 * FM, 1), p2),
            pl.BlockSpec((2 * F, M, 1), p3),
            pl.BlockSpec((H, FM), p2),
            pl.BlockSpec((H, 1), p2),
            pl.BlockSpec((H, 1), p2),
            pl.BlockSpec((1, 1), p2),
        ],
        out_specs=pl.BlockSpec((2, block_b), lambda i: (0, i)),
        compiler_params=pltpu.CompilerParams(
            # Independent batch tiles -> shard across TensorCores (2 on v7x).
            dimension_semantics=("parallel",)),
    )(xT, inv_a, neg_b, c3, w1t, b1c, w2c, b2c)

    # (2, Bp2) -> flatten the halves back into batch order, drop padding.
    return out.reshape(-1)[:B].reshape(B, 1)


def init_params(key, in_features, mf_per_input, hidden_dim):
    F, M, H = in_features, mf_per_input, hidden_dim
    # BellMF parameters (same as the PyTorch __init__)
    a = jnp.ones((F, M), jnp.float32)
    b = jnp.ones((F, M), jnp.float32)
    c = jnp.tile(jnp.linspace(0.0, 1.0, M, dtype=jnp.float32), (F, 1))

    # Linear layers: uniform(-1/sqrt(fan_in), 1/sqrt(fan_in)) like nn.Linear
    k1, k2, k3, k4 = jax.random.split(key, 4)
    lim1 = 1.0 / jnp.sqrt(jnp.float32(F * M))
    w1 = jax.random.uniform(k1, (F * M, H), jnp.float32, -lim1, lim1)
    b1 = jax.random.uniform(k2, (H,), jnp.float32, -lim1, lim1)
    lim2 = 1.0 / jnp.sqrt(jnp.float32(H))
    w2 = jax.random.uniform(k3, (H, 1), jnp.float32, -lim2, lim2)
    b2 = jax.random.uniform(k4, (1,), jnp.float32, -lim2, lim2)
    return (a, b, c, w1, b1, w2, b2)


def reference_forward(x, params):
    a, b, c, w1, b1, w2, b2 = params
    x_e = x[:, :, None]
    mf = 1.0 / (1.0 + jnp.abs((x_e - c[None]) / a[None]) ** (2.0 * b[None]))
    combined = mf.reshape(x.shape[0], -1)
    h = jnp.maximum(combined @ w1 + b1, 0.0)
    return h @ w2 + b2


if __name__ == "__main__":
    # Small but grid-exercising shapes: B=600 with block_b=128 -> 3 grid steps,
    # each covering 256 batch lanes, plus 168 padded lanes that are sliced off.
    B, F, M, H = 600, 4, 4, 16
    key = jax.random.PRNGKey(0)
    kx, kp = jax.random.split(key)
    x = jax.random.uniform(kx, (B, F), jnp.float32)
    params = init_params(kp, F, M, H)

    out = jax.block_until_ready(simple_anfis_forward(x, params, block_b=128))
    ref = reference_forward(x, params)

    assert out.shape == (B, 1)
    err = float(jnp.max(jnp.abs(out - ref)))
    assert jnp.allclose(out, ref, atol=2e-3, rtol=2e-3), f"max abs err {err}"
    print("KERNEL_OK")
</pallas_src>

<mosaic_0001>
module attributes {stable_mosaic.version = 11 : i64} {
  func.func @anfis_kernel(%arg0: i32, %arg1: memref<8x128xf32, #tpu.memory_space<vmem>>, %arg2: memref<8x4x1xf32, #tpu.memory_space<vmem>>, %arg3: memref<32x1xf32, #tpu.memory_space<vmem>>, %arg4: memref<8x4x1xf32, #tpu.memory_space<vmem>>, %arg5: memref<16x16xf32, #tpu.memory_space<vmem>>, %arg6: memref<16x1xf32, #tpu.memory_space<vmem>>, %arg7: memref<16x1xf32, #tpu.memory_space<vmem>>, %arg8: memref<1x1xf32, #tpu.memory_space<vmem>>, %arg9: memref<2x128xf32, #tpu.memory_space<vmem>>) attributes {dimension_semantics = [#tpu.dimension_semantics<parallel>], iteration_bounds = array<i64: 3>, scalar_prefetch = 0 : i64, scratch_operands = 0 : i64, tpu.core_type = #tpu.core_type<tc>, window_params = [{transform_indices = @transform_0, window_bounds = array<i64: 8, 128>}, {pipeline_mode = #tpu.pipeline_mode<synchronous>, transform_indices = @transform_1, window_bounds = array<i64: 8, 4, 1>}, {pipeline_mode = #tpu.pipeline_mode<synchronous>, transform_indices = @transform_2, window_bounds = array<i64: 32, 1>}, {pipeline_mode = #tpu.pipeline_mode<synchronous>, transform_indices = @transform_3, window_bounds = array<i64: 8, 4, 1>}, {pipeline_mode = #tpu.pipeline_mode<synchronous>, transform_indices = @transform_4, window_bounds = array<i64: 16, 16>}, {pipeline_mode = #tpu.pipeline_mode<synchronous>, transform_indices = @transform_5, window_bounds = array<i64: 16, 1>}, {pipeline_mode = #tpu.pipeline_mode<synchronous>, transform_indices = @transform_6, window_bounds = array<i64: 16, 1>}, {pipeline_mode = #tpu.pipeline_mode<synchronous>, transform_indices = @transform_7, window_bounds = array<i64: 1, 1>}, {transform_indices = @transform_8, window_bounds = array<i64: 2, 128>}]} {
    %c0 = arith.constant 0 : index
    %c0_0 = arith.constant 0 : index
    %0 = vector.load %arg1[%c0, %c0_0] : memref<8x128xf32, #tpu.memory_space<vmem>>, vector<1x128xf32>
    %c0_1 = arith.constant 0 : index
    %c0_2 = arith.constant 0 : index
    %c0_3 = arith.constant 0 : index
    %1 = vector.load %arg4[%c0_1, %c0_2, %c0_3] : memref<8x4x1xf32, #tpu.memory_space<vmem>>, vector<1x4x1xf32>
    %2 = vector.shape_cast %1 : vector<1x4x1xf32> to vector<4x1xf32>
    %3 = vector.broadcast %0 : vector<1x128xf32> to vector<4x128xf32>
    %4 = vector.broadcast %2 : vector<4x1xf32> to vector<4x128xf32>
    %5 = arith.subf %3, %4 : vector<4x128xf32>
    %c0_4 = arith.constant 0 : index
    %c0_5 = arith.constant 0 : index
    %c0_6 = arith.constant 0 : index
    %6 = vector.load %arg2[%c0_4, %c0_5, %c0_6] : memref<8x4x1xf32, #tpu.memory_space<vmem>>, vector<1x4x1xf32>
    %7 = vector.shape_cast %6 : vector<1x4x1xf32> to vector<4x1xf32>
    %8 = vector.broadcast %7 : vector<4x1xf32> to vector<4x128xf32>
    %9 = arith.mulf %5, %8 : vector<4x128xf32>
    %10 = math.absf %9 : vector<4x128xf32>
    %c1 = arith.constant 1 : index
    %c0_7 = arith.constant 0 : index
    %11 = vector.load %arg1[%c1, %c0_7] : memref<8x128xf32, #tpu.memory_space<vmem>>, vector<1x128xf32>
    %c1_8 = arith.constant 1 : index
    %c0_9 = arith.constant 0 : index
    %c0_10 = arith.constant 0 : index
    %12 = vector.load %arg4[%c1_8, %c0_9, %c0_10] : memref<8x4x1xf32, #tpu.memory_space<vmem>>, vector<1x4x1xf32>
    %13 = vector.shape_cast %12 : vector<1x4x1xf32> to vector<4x1xf32>
    %14 = vector.broadcast %11 : vector<1x128xf32> to vector<4x128xf32>
    %15 = vector.broadcast %13 : vector<4x1xf32> to vector<4x128xf32>
    %16 = arith.subf %14, %15 : vector<4x128xf32>
    %c1_11 = arith.constant 1 : index
    %c0_12 = arith.constant 0 : index
    %c0_13 = arith.constant 0 : index
    %17 = vector.load %arg2[%c1_11, %c0_12, %c0_13] : memref<8x4x1xf32, #tpu.memory_space<vmem>>, vector<1x4x1xf32>
    %18 = vector.shape_cast %17 : vector<1x4x1xf32> to vector<4x1xf32>
    %19 = vector.broadcast %18 : vector<4x1xf32> to vector<4x128xf32>
    %20 = arith.mulf %16, %19 : vector<4x128xf32>
    %21 = math.absf %20 : vector<4x128xf32>
    %c2 = arith.constant 2 : index
    %c0_14 = arith.constant 0 : index
    %22 = vector.load %arg1[%c2, %c0_14] : memref<8x128xf32, #tpu.memory_space<vmem>>, vector<1x128xf32>
    %c2_15 = arith.constant 2 : index
    %c0_16 = arith.constant 0 : index
    %c0_17 = arith.constant 0 : index
    %23 = vector.load %arg4[%c2_15, %c0_16, %c0_17] : memref<8x4x1xf32, #tpu.memory_space<vmem>>, vector<1x4x1xf32>
    %24 = vector.shape_cast %23 : vector<1x4x1xf32> to vector<4x1xf32>
    %25 = vector.broadcast %22 : vector<1x128xf32> to vector<4x128xf32>
    %26 = vector.broadcast %24 : vector<4x1xf32> to vector<4x128xf32>
    %27 = arith.subf %25, %26 : vector<4x128xf32>
    %c2_18 = arith.constant 2 : index
    %c0_19 = arith.constant 0 : index
    %c0_20 = arith.constant 0 : index
    %28 = vector.load %arg2[%c2_18, %c0_19, %c0_20] : memref<8x4x1xf32, #tpu.memory_space<vmem>>, vector<1x4x1xf32>
    %29 = vector.shape_cast %28 : vector<1x4x1xf32> to vector<4x1xf32>
    %30 = vector.broadcast %29 : vector<4x1xf32> to vector<4x128xf32>
    %31 = arith.mulf %27, %30 : vector<4x128xf32>
    %32 = math.absf %31 : vector<4x128xf32>
    %c3 = arith.constant 3 : index
    %c0_21 = arith.constant 0 : index
    %33 = vector.load %arg1[%c3, %c0_21] : memref<8x128xf32, #tpu.memory_space<vmem>>, vector<1x128xf32>
    %c3_22 = arith.constant 3 : index
    %c0_23 = arith.constant 0 : index
    %c0_24 = arith.constant 0 : index
    %34 = vector.load %arg4[%c3_22, %c0_23, %c0_24] : memref<8x4x1xf32, #tpu.memory_space<vmem>>, vector<1x4x1xf32>
    %35 = vector.shape_cast %34 : vector<1x4x1xf32> to vector<4x1xf32>
    %36 = vector.broadcast %33 : vector<1x128xf32> to vector<4x128xf32>
    %37 = vector.broadcast %35 : vector<4x1xf32> to vector<4x128xf32>
    %38 = arith.subf %36, %37 : vector<4x128xf32>
    %c3_25 = arith.constant 3 : index
    %c0_26 = arith.constant 0 : index
    %c0_27 = arith.constant 0 : index
    %39 = vector.load %arg2[%c3_25, %c0_26, %c0_27] : memref<8x4x1xf32, #tpu.memory_space<vmem>>, vector<1x4x1xf32>
    %40 = vector.shape_cast %39 : vector<1x4x1xf32> to vector<4x1xf32>
    %41 = vector.broadcast %40 : vector<4x1xf32> to vector<4x128xf32>
    %42 = arith.mulf %38, %41 : vector<4x128xf32>
    %43 = math.absf %42 : vector<4x128xf32>
    %c4 = arith.constant 4 : index
    %c0_28 = arith.constant 0 : index
    %44 = vector.load %arg1[%c4, %c0_28] : memref<8x128xf32, #tpu.memory_space<vmem>>, vector<1x128xf32>
    %c4_29 = arith.constant 4 : index
    %c0_30 = arith.constant 0 : index
    %c0_31 = arith.constant 0 : index
    %45 = vector.load %arg4[%c4_29, %c0_30, %c0_31] : memref<8x4x1xf32, #tpu.memory_space<vmem>>, vector<1x4x1xf32>
    %46 = vector.shape_cast %45 : vector<1x4x1xf32> to vector<4x1xf32>
    %47 = vector.broadcast %44 : vector<1x128xf32> to vector<4x128xf32>
    %48 = vector.broadcast %46 : vector<4x1xf32> to vector<4x128xf32>
    %49 = arith.subf %47, %48 : vector<4x128xf32>
    %c4_32 = arith.constant 4 : index
    %c0_33 = arith.constant 0 : index
    %c0_34 = arith.constant 0 : index
    %50 = vector.load %arg2[%c4_32, %c0_33, %c0_34] : memref<8x4x1xf32, #tpu.memory_space<vmem>>, vector<1x4x1xf32>
    %51 = vector.shape_cast %50 : vector<1x4x1xf32> to vector<4x1xf32>
    %52 = vector.broadcast %51 : vector<4x1xf32> to vector<4x128xf32>
    %53 = arith.mulf %49, %52 : vector<4x128xf32>
    %54 = math.absf %53 : vector<4x128xf32>
    %c5 = arith.constant 5 : index
    %c0_35 = arith.constant 0 : index
    %55 = vector.load %arg1[%c5, %c0_35] : memref<8x128xf32, #tpu.memory_space<vmem>>, vector<1x128xf32>
    %c5_36 = arith.constant 5 : index
    %c0_37 = arith.constant 0 : index
    %c0_38 = arith.constant 0 : index
    %56 = vector.load %arg4[%c5_36, %c0_37, %c0_38] : memref<8x4x1xf32, #tpu.memory_space<vmem>>, vector<1x4x1xf32>
    %57 = vector.shape_cast %56 : vector<1x4x1xf32> to vector<4x1xf32>
    %58 = vector.broadcast %55 : vector<1x128xf32> to vector<4x128xf32>
    %59 = vector.broadcast %57 : vector<4x1xf32> to vector<4x128xf32>
    %60 = arith.subf %58, %59 : vector<4x128xf32>
    %c5_39 = arith.constant 5 : index
    %c0_40 = arith.constant 0 : index
    %c0_41 = arith.constant 0 : index
    %61 = vector.load %arg2[%c5_39, %c0_40, %c0_41] : memref<8x4x1xf32, #tpu.memory_space<vmem>>, vector<1x4x1xf32>
    %62 = vector.shape_cast %61 : vector<1x4x1xf32> to vector<4x1xf32>
    %63 = vector.broadcast %62 : vector<4x1xf32> to vector<4x128xf32>
    %64 = arith.mulf %60, %63 : vector<4x128xf32>
    %65 = math.absf %64 : vector<4x128xf32>
    %c6 = arith.constant 6 : index
    %c0_42 = arith.constant 0 : index
    %66 = vector.load %arg1[%c6, %c0_42] : memref<8x128xf32, #tpu.memory_space<vmem>>, vector<1x128xf32>
    %c6_43 = arith.constant 6 : index
    %c0_44 = arith.constant 0 : index
    %c0_45 = arith.constant 0 : index
    %67 = vector.load %arg4[%c6_43, %c0_44, %c0_45] : memref<8x4x1xf32, #tpu.memory_space<vmem>>, vector<1x4x1xf32>
    %68 = vector.shape_cast %67 : vector<1x4x1xf32> to vector<4x1xf32>
    %69 = vector.broadcast %66 : vector<1x128xf32> to vector<4x128xf32>
    %70 = vector.broadcast %68 : vector<4x1xf32> to vector<4x128xf32>
    %71 = arith.subf %69, %70 : vector<4x128xf32>
    %c6_46 = arith.constant 6 : index
    %c0_47 = arith.constant 0 : index
    %c0_48 = arith.constant 0 : index
    %72 = vector.load %arg2[%c6_46, %c0_47, %c0_48] : memref<8x4x1xf32, #tpu.memory_space<vmem>>, vector<1x4x1xf32>
    %73 = vector.shape_cast %72 : vector<1x4x1xf32> to vector<4x1xf32>
    %74 = vector.broadcast %73 : vector<4x1xf32> to vector<4x128xf32>
    %75 = arith.mulf %71, %74 : vector<4x128xf32>
    %76 = math.absf %75 : vector<4x128xf32>
    %c7 = arith.constant 7 : index
    %c0_49 = arith.constant 0 : index
    %77 = vector.load %arg1[%c7, %c0_49] : memref<8x128xf32, #tpu.memory_space<vmem>>, vector<1x128xf32>
    %c7_50 = arith.constant 7 : index
    %c0_51 = arith.constant 0 : index
    %c0_52 = arith.constant 0 : index
    %78 = vector.load %arg4[%c7_50, %c0_51, %c0_52] : memref<8x4x1xf32, #tpu.memory_space<vmem>>, vector<1x4x1xf32>
    %79 = vector.shape_cast %78 : vector<1x4x1xf32> to vector<4x1xf32>
    %80 = vector.broadcast %77 : vector<1x128xf32> to vector<4x128xf32>
    %81 = vector.broadcast %79 : vector<4x1xf32> to vector<4x128xf32>
    %82 = arith.subf %80, %81 : vector<4x128xf32>
    %c7_53 = arith.constant 7 : index
    %c0_54 = arith.constant 0 : index
    %c0_55 = arith.constant 0 : index
    %83 = vector.load %arg2[%c7_53, %c0_54, %c0_55] : memref<8x4x1xf32, #tpu.memory_space<vmem>>, vector<1x4x1xf32>
    %84 = vector.shape_cast %83 : vector<1x4x1xf32> to vector<4x1xf32>
    %85 = vector.broadcast %84 : vector<4x1xf32> to vector<4x128xf32>
    %86 = arith.mulf %82, %85 : vector<4x128xf32>
    %87 = math.absf %86 : vector<4x128xf32>
    %88 = tpu.concatenate %10, %21, %32, %43, %54, %65, %76, %87 in 0 : vector<4x128xf32>, vector<4x128xf32>, vector<4x128xf32>, vector<4x128xf32>, vector<4x128xf32>, vector<4x128xf32>, vector<4x128xf32>, vector<4x128xf32> -> vector<32x128xf32>
    %cst = arith.constant 1.000000e-30 : f32
    %89 = vector.broadcast %cst : f32 to vector<32x128xf32>
    %90 = arith.maximumf %88, %89 : vector<32x128xf32>
    %c0_56 = arith.constant 0 : index
    %c0_57 = arith.constant 0 : index
    %91 = vector.load %arg3[%c0_56, %c0_57] : memref<32x1xf32, #tpu.memory_space<vmem>>, vector<32x1xf32>
    %92 = math.log %90 : vector<32x128xf32>
    %93 = vector.broadcast %91 : vector<32x1xf32> to vector<32x128xf32>
    %94 = arith.mulf %93, %92 : vector<32x128xf32>
    %95 = math.tanh %94 : vector<32x128xf32>
    %cst_58 = arith.constant 1.000000e+00 : f32
    %96 = vector.broadcast %cst_58 : f32 to vector<32x128xf32>
    %97 = arith.addf %96, %95 : vector<32x128xf32>
    %cst_59 = arith.constant 5.000000e-01 : f32
    %98 = vector.broadcast %cst_59 : f32 to vector<32x128xf32>
    %99 = arith.mulf %98, %97 : vector<32x128xf32>
    %c0_60 = arith.constant 0 : index
    %c0_61 = arith.constant 0 : index
    %100 = vector.load %arg5[%c0_60, %c0_61] : memref<16x16xf32, #tpu.memory_space<vmem>>, vector<16x16xf32>
    %c0_62 = arith.constant 0 : index
    %c0_63 = arith.constant 0 : index
    %101 = vector.load %arg6[%c0_62, %c0_63] : memref<16x1xf32, #tpu.memory_space<vmem>>, vector<16x1xf32>
    %c0_64 = arith.constant 0 : index
    %c0_65 = arith.constant 0 : index
    %102 = vector.load %arg7[%c0_64, %c0_65] : memref<16x1xf32, #tpu.memory_space<vmem>>, vector<16x1xf32>
    %c0_66 = arith.constant 0 : index
    %c0_67 = arith.constant 0 : index
    %103 = vector.load %arg8[%c0_66, %c0_67] : memref<1x1xf32, #tpu.memory_space<vmem>>, vector<1x1xf32>
    %104 = vector.extract_strided_slice %99 {offsets = [0, 0], sizes = [16, 128], strides = [1, 1]} : vector<32x128xf32> to vector<16x128xf32>
    %cst_68 = arith.constant dense<0.000000e+00> : vector<16x128xf32>
    %105 = tpu.matmul %100, %104, %cst_68 {dimension_numbers = #tpu.dot_dimension_numbers<[1], [0], [0], [1], [0, 0, 1, 1], [], []>} : vector<16x16xf32>, vector<16x128xf32>, vector<16x128xf32> -> vector<16x128xf32>
    %106 = vector.broadcast %101 : vector<16x1xf32> to vector<16x128xf32>
    %107 = arith.addf %105, %106 : vector<16x128xf32>
    %cst_69 = arith.constant 0.000000e+00 : f32
    %108 = vector.broadcast %cst_69 : f32 to vector<16x128xf32>
    %109 = arith.maximumf %107, %108 : vector<16x128xf32>
    %110 = vector.broadcast %102 : vector<16x1xf32> to vector<16x128xf32>
    %111 = arith.mulf %109, %110 : vector<16x128xf32>
    %cst_70 = arith.constant dense<0.000000e+00> : vector<128xf32>
    %112 = vector.multi_reduction <add>, %111, %cst_70 [0] : vector<16x128xf32> to vector<128xf32>
    %113 = vector.shape_cast %112 : vector<128xf32> to vector<1x128xf32>
    %114 = vector.broadcast %103 : vector<1x1xf32> to vector<1x128xf32>
    %115 = arith.addf %113, %114 : vector<1x128xf32>
    %116 = vector.extract_strided_slice %99 {offsets = [16, 0], sizes = [16, 128], strides = [1, 1]} : vector<32x128xf32> to vector<16x128xf32>
    %cst_71 = arith.constant dense<0.000000e+00> : vector<16x128xf32>
    %117 = tpu.matmul %100, %116, %cst_71 {dimension_numbers = #tpu.dot_dimension_numbers<[1], [0], [0], [1], [0, 0, 1, 1], [], []>} : vector<16x16xf32>, vector<16x128xf32>, vector<16x128xf32> -> vector<16x128xf32>
    %118 = vector.broadcast %101 : vector<16x1xf32> to vector<16x128xf32>
    %119 = arith.addf %117, %118 : vector<16x128xf32>
    %cst_72 = arith.constant 0.000000e+00 : f32
    %120 = vector.broadcast %cst_72 : f32 to vector<16x128xf32>
    %121 = arith.maximumf %119, %120 : vector<16x128xf32>
    %122 = vector.broadcast %102 : vector<16x1xf32> to vector<16x128xf32>
    %123 = arith.mulf %121, %122 : vector<16x128xf32>
    %cst_73 = arith.constant dense<0.000000e+00> : vector<128xf32>
    %124 = vector.multi_reduction <add>, %123, %cst_73 [0] : vector<16x128xf32> to vector<128xf32>
    %125 = vector.shape_cast %124 : vector<128xf32> to vector<1x128xf32>
    %126 = vector.broadcast %103 : vector<1x1xf32> to vector<1x128xf32>
    %127 = arith.addf %125, %126 : vector<1x128xf32>
    %128 = tpu.concatenate %115, %127 in 0 : vector<1x128xf32>, vector<1x128xf32> -> vector<2x128xf32>
    %c0_74 = arith.constant 0 : index
    %c0_75 = arith.constant 0 : index
    %129 = vector.load %arg9[%c0_74, %c0_75] : memref<2x128xf32, #tpu.memory_space<vmem>>, vector<2x128xf32>
    tpu.vector_store %arg9[%c0_74, %c0_75], %128 {strides = array<i32>} : memref<2x128xf32, #tpu.memory_space<vmem>>, vector<2x128xf32>,
    return
  }
  func.func @transform_0(%arg0: i32) -> (i32, i32) {
    %c0_i32 = arith.constant 0 : i32
    %c0_i32_0 = arith.constant 0 : i32
    return %c0_i32, %arg0 : i32, i32
  }
  func.func @transform_1(%arg0: i32) -> (i32, i32, i32) {
    %c0_i32 = arith.constant 0 : i32
    %c0_i32_0 = arith.constant 0 : i32
    %c0_i32_1 = arith.constant 0 : i32
    %c0_i32_2 = arith.constant 0 : i32
    return %c0_i32, %c0_i32_0, %c0_i32_1 : i32, i32, i32
  }
  func.func @transform_2(%arg0: i32) -> (i32, i32) {
    %c0_i32 = arith.constant 0 : i32
    %c0_i32_0 = arith.constant 0 : i32
    %c0_i32_1 = arith.constant 0 : i32
    return %c0_i32, %c0_i32_0 : i32, i32
  }
  func.func @transform_3(%arg0: i32) -> (i32, i32, i32) {
    %c0_i32 = arith.constant 0 : i32
    %c0_i32_0 = arith.constant 0 : i32
    %c0_i32_1 = arith.constant 0 : i32
    %c0_i32_2 = arith.constant 0 : i32
    return %c0_i32, %c0_i32_0, %c0_i32_1 : i32, i32, i32
  }
  func.func @transform_4(%arg0: i32) -> (i32, i32) {
    %c0_i32 = arith.constant 0 : i32
    %c0_i32_0 = arith.constant 0 : i32
    %c0_i32_1 = arith.constant 0 : i32
    return %c0_i32, %c0_i32_0 : i32, i32
  }
  func.func @transform_5(%arg0: i32) -> (i32, i32) {
    %c0_i32 = arith.constant 0 : i32
    %c0_i32_0 = arith.constant 0 : i32
    %c0_i32_1 = arith.constant 0 : i32
    return %c0_i32, %c0_i32_0 : i32, i32
  }
  func.func @transform_6(%arg0: i32) -> (i32, i32) {
    %c0_i32 = arith.constant 0 : i32
    %c0_i32_0 = arith.constant 0 : i32
    %c0_i32_1 = arith.constant 0 : i32
    return %c0_i32, %c0_i32_0 : i32, i32
  }
  func.func @transform_7(%arg0: i32) -> (i32, i32) {
    %c0_i32 = arith.constant 0 : i32
    %c0_i32_0 = arith.constant 0 : i32
    %c0_i32_1 = arith.constant 0 : i32
    return %c0_i32, %c0_i32_0 : i32, i32
  }
  func.func @transform_8(%arg0: i32) -> (i32, i32) {
    %c0_i32 = arith.constant 0 : i32
    %c0_i32_0 = arith.constant 0 : i32
    return %c0_i32, %arg0 : i32, i32
  }
}

</mosaic_0001>

<llo_original>
// kernel: tpu_custom_call.1
$region0: #{tpu_custom_call.1}
  #allocation0 [shape = 'u32[]', space=smem, size = 0x4, offset = 0x4, fixed_abs, tag = 'smem constant byte address 0x4 - core index']
  #allocation1 [shape = 'u32[144,128]{1,0:T(1,128)}', space=vmem, size = 0x12000, scoped, tag = 'internal scratch']
  #allocation2 [shape = 'f32[1,1]{1,0:T(1,128)S(1)}', space=vmem, size = 0x200, scoped, tag = 'scoped memory for tpu_custom_call.1']
  %s0 = inlined_call_operand.vmem [shape: f32[8,384], index: 0, kind: input, shape index: {}]
  %s1 = inlined_call_operand.vmem [shape: f32[8,4,1], index: 1, kind: input, shape index: {}]
  %s2 = inlined_call_operand.vmem [shape: f32[32,1], index: 2, kind: input, shape index: {}]
  %s3 = inlined_call_operand.vmem [shape: f32[8,4,1], index: 3, kind: input, shape index: {}]
  %s4 = inlined_call_operand.vmem [shape: f32[16,16], index: 4, kind: input, shape index: {}]
  %s5 = inlined_call_operand.vmem [shape: f32[16,1], index: 5, kind: input, shape index: {}]
  %s6 = inlined_call_operand.vmem [shape: f32[16,1], index: 6, kind: input, shape index: {}]
  %s7 = inlined_call_operand.<no memory space> [shape: f32[1,1], index: 7, kind: input, shape index: {}]
  %s8 = inlined_call_operand.hbm [shape: f32[2,384], index: 8, kind: output, shape index: {}]
  %s9 = sld [smem:[#allocation0]]
  $region65: #{tpu_custom_call.1} parent=0
    _
  %s11 = ssub.s32 1, %s9
  %s12 = scalar_select 0, %s11, %s9
  %v13 = vstv %s7
  %14 = vst [vmem:[#allocation2] sm:$0x1] %v13
  $region1: #{tpu_custom_call.1} parent=0
    #allocation3 [shape = 'u8[2048]{0}', space=vmem, size = 0x800, scoped, tag = 'output window, operand 0']
    #allocation4 [shape = 's32[2]{0}', space=sflag, size = 0x8, scoped, tag = 'scoped memory for tpu_custom_call.1']
    %15 = vsyncpa [#allocation4], 0
    %s16 = scalar_lea.sflag [#allocation4], 1
    %17 = vsyncpa %s16, 0
    loop: start=0, step=1, limit=5
    $region2: #{tpu_custom_call.1} parent=1 // loop_pre_header
      _
    $region3: #{tpu_custom_call.1} parent=1 // loop_header
      %s19 = sphi 0, %s23
      %p20 = scmp.ge.s32.totalorder %s19, 5
      %s29 = sphi 0, %s31
      %s32 = sphi 0, %s29
      %s33 = sphi 0, %s32
      %s49 = sphi 0, %s33
      %s53 = sphi 0, %s53
      %s55 = sphi 0, %s53
      %s56 = sphi 0, %s55
      %s70 = sphi 0, %s56
      %s74 = sphi 0, %s74
      %s76 = sphi 0, %s74
      %s77 = sphi 0, %s76
      %s91 = sphi 0, %s77
      %s95 = sphi 0, %s95
      %s97 = sphi 0, %s95
      %s98 = sphi 0, %s97
      %s112 = sphi 0, %s98
      %s116 = sphi 0, %s116
      %s118 = sphi 0, %s116
      %s119 = sphi 0, %s118
      %s133 = sphi 0, %s119
      %s137 = sphi 0, %s137
      %s139 = sphi 0, %s137
      %s140 = sphi 0, %s139
      %s154 = sphi 0, %s140
      %s158 = sphi 0, %s158
      %s160 = sphi 0, %s158
      %s161 = sphi 0, %s160
      %s175 = sphi 0, %s161
      %s179 = sphi 0, %s179
      %s181 = sphi 0, %s179
      %s182 = sphi 0, %s181
      %s196 = sphi 0, %s182
      %s202 = sphi 0, %s204
      %s205 = sphi 0, %s202
      %s206 = sphi 0, %s205
      %s222 = sphi 0, %s206
    $region4: #{tpu_custom_call.1} parent=1 // loop_header_branch
      %22 = sbr.rel (%p20) target = $region8
    $region5: #{tpu_custom_call.1} parent=1 // loop_body
      %s24 = ssub.s32 %s19, 1
      %s25 = ssub.s32 %s19, 2
      %s26 = sadd.s32 %s19, 1
      %s27 = ssub.s32 %s19, %s26
      %p28 = scmp.eq.s32.totalorder %s27, 0
      %s30 = sadd.s32 %s29, 1
      %s31 = scalar_select %p28, %s29, %s30
      %p34 = pneg %p28
      %p35 = scmp.eq.s32.totalorder %s19, 2
      %p36 = por %p34, %p35
      %p37 = scmp.ne.s32.totalorder %s29, %s32
      %p38 = scmp.eq.s32.totalorder %s19, 0
      %p39 = por %p37, %p38
      %p40 = scmp.ne.s32.totalorder %s29, %s32
      %p41 = scmp.eq.s32.totalorder %s24, 2
      %p42 = por %p40, %p41
      %p43 = scmp.ne.s32.totalorder %s32, %s33
      %p44 = scmp.eq.s32.totalorder %s24, 0
      %p45 = por %p43, %p44
      %p46 = scmp.ne.s32.totalorder %s32, %s33
      %p47 = scmp.eq.s32.totalorder %s25, 2
      %p48 = por %p46, %p47
      %p50 = scmp.ne.s32.totalorder %s33, %s49
      %p51 = scmp.eq.s32.totalorder %s25, 0
      %p52 = por %p50, %p51
      %s54 = sadd.s32 %s53, 1
      %p57 = scmp.eq.s32.totalorder %s19, 2
      %p58 = scmp.ne.s32.totalorder %s53, %s55
      %p59 = scmp.eq.s32.totalorder %s19, 0
      %p60 = por %p58, %p59
      %p61 = scmp.ne.s32.totalorder %s53, %s55
      %p62 = scmp.eq.s32.totalorder %s24, 2
      %p63 = por %p61, %p62
      %p64 = scmp.ne.s32.totalorder %s55, %s56
      %p65 = scmp.eq.s32.totalorder %s24, 0
      %p66 = por %p64, %p65
      %p67 = scmp.ne.s32.totalorder %s55, %s56
      %p68 = scmp.eq.s32.totalorder %s25, 2
      %p69 = por %p67, %p68
      %p71 = scmp.ne.s32.totalorder %s56, %s70
      %p72 = scmp.eq.s32.totalorder %s25, 0
      %p73 = por %p71, %p72
      %s75 = sadd.s32 %s74, 1
      %p78 = scmp.eq.s32.totalorder %s19, 2
      %p79 = scmp.ne.s32.totalorder %s74, %s76
      %p80 = scmp.eq.s32.totalorder %s19, 0
      %p81 = por %p79, %p80
      %p82 = scmp.ne.s32.totalorder %s74, %s76
      %p83 = scmp.eq.s32.totalorder %s24, 2
      %p84 = por %p82, %p83
      %p85 = scmp.ne.s32.totalorder %s76, %s77
      %p86 = scmp.eq.s32.totalorder %s24, 0
      %p87 = por %p85, %p86
      %p88 = scmp.ne.s32.totalorder %s76, %s77
      %p89 = scmp.eq.s32.totalorder %s25, 2
      %p90 = por %p88, %p89
      %p92 = scmp.ne.s32.totalorder %s77, %s91
      %p93 = scmp.eq.s32.totalorder %s25, 0
      %p94 = por %p92, %p93
      %s96 = sadd.s32 %s95, 1
      %p99 = scmp.eq.s32.totalorder %s19, 2
      %p100 = scmp.ne.s32.totalorder %s95, %s97
      %p101 = scmp.eq.s32.totalorder %s19, 0
      %p102 = por %p100, %p101
      %p103 = scmp.ne.s32.totalorder %s95, %s97
      %p104 = scmp.eq.s32.totalorder %s24, 2
      %p105 = por %p103, %p104
      %p106 = scmp.ne.s32.totalorder %s97, %s98
      %p107 = scmp.eq.s32.totalorder %s24, 0
      %p108 = por %p106, %p107
      %p109 = scmp.ne.s32.totalorder %s97, %s98
      %p110 = scmp.eq.s32.totalorder %s25, 2
      %p111 = por %p109, %p110
      %p113 = scmp.ne.s32.totalorder %s98, %s112
      %p114 = scmp.eq.s32.totalorder %s25, 0
      %p115 = por %p113, %p114
      %s117 = sadd.s32 %s116, 1
      %p120 = scmp.eq.s32.totalorder %s19, 2
      %p121 = scmp.ne.s32.totalorder %s116, %s118
      %p122 = scmp.eq.s32.totalorder %s19, 0
      %p123 = por %p121, %p122
      %p124 = scmp.ne.s32.totalorder %s116, %s118
      %p125 = scmp.eq.s32.totalorder %s24, 2
      %p126 = por %p124, %p125
      %p127 = scmp.ne.s32.totalorder %s118, %s119
      %p128 = scmp.eq.s32.totalorder %s24, 0
      %p129 = por %p127, %p128
      %p130 = scmp.ne.s32.totalorder %s118, %s119
      %p131 = scmp.eq.s32.totalorder %s25, 2
      %p132 = por %p130, %p131
      %p134 = scmp.ne.s32.totalorder %s119, %s133
      %p135 = scmp.eq.s32.totalorder %s25, 0
      %p136 = por %p134, %p135
      %s138 = sadd.s32 %s137, 1
      %p141 = scmp.eq.s32.totalorder %s19, 2
      %p142 = scmp.ne.s32.totalorder %s137, %s139
      %p143 = scmp.eq.s32.totalorder %s19, 0
      %p144 = por %p142, %p143
      %p145 = scmp.ne.s32.totalorder %s137, %s139
      %p146 = scmp.eq.s32.totalorder %s24, 2
      %p147 = por %p145, %p146
      %p148 = scmp.ne.s32.totalorder %s139, %s140
      %p149 = scmp.eq.s32.totalorder %s24, 0
      %p150 = por %p148, %p149
      %p151 = scmp.ne.s32.totalorder %s139, %s140
      %p152 = scmp.eq.s32.totalorder %s25, 2
      %p153 = por %p151, %p152
      %p155 = scmp.ne.s32.totalorder %s140, %s154
      %p156 = scmp.eq.s32.totalorder %s25, 0
      %p157 = por %p155, %p156
      %s159 = sadd.s32 %s158, 1
      %p162 = scmp.eq.s32.totalorder %s19, 2
      %p163 = scmp.ne.s32.totalorder %s158, %s160
      %p164 = scmp.eq.s32.totalorder %s19, 0
      %p165 = por %p163, %p164
      %p166 = scmp.ne.s32.totalorder %s158, %s160
      %p167 = scmp.eq.s32.totalorder %s24, 2
      %p168 = por %p166, %p167
      %p169 = scmp.ne.s32.totalorder %s160, %s161
      %p170 = scmp.eq.s32.totalorder %s24, 0
      %p171 = por %p169, %p170
      %p172 = scmp.ne.s32.totalorder %s160, %s161
      %p173 = scmp.eq.s32.totalorder %s25, 2
      %p174 = por %p172, %p173
      %p176 = scmp.ne.s32.totalorder %s161, %s175
      %p177 = scmp.eq.s32.totalorder %s25, 0
      %p178 = por %p176, %p177
      %s180 = sadd.s32 %s179, 1
      %p183 = scmp.eq.s32.totalorder %s19, 2
      %p184 = scmp.ne.s32.totalorder %s179, %s181
      %p185 = scmp.eq.s32.totalorder %s19, 0
      %p186 = por %p184, %p185
      %p187 = scmp.ne.s32.totalorder %s179, %s181
      %p188 = scmp.eq.s32.totalorder %s24, 2
      %p189 = por %p187, %p188
      %p190 = scmp.ne.s32.totalorder %s181, %s182
      %p191 = scmp.eq.s32.totalorder %s24, 0
      %p192 = por %p190, %p191
      %p193 = scmp.ne.s32.totalorder %s181, %s182
      %p194 = scmp.eq.s32.totalorder %s25, 2
      %p195 = por %p193, %p194
      %p197 = scmp.ne.s32.totalorder %s182, %s196
      %p198 = scmp.eq.s32.totalorder %s25, 0
      %p199 = por %p197, %p198
      %s200 = ssub.s32 %s19, %s26
      %p201 = scmp.eq.s32.totalorder %s200, 0
      %s203 = sadd.s32 %s202, 1
      %s204 = scalar_select %p201, %s202, %s203
      %p207 = pneg %p201
      %p208 = scmp.eq.s32.totalorder %s19, 2
      %p209 = por %p207, %p208
      %p210 = scmp.ne.s32.totalorder %s202, %s205
      %p211 = scmp.eq.s32.totalorder %s19, 0
      %p212 = por %p210, %p211
      %p213 = scmp.ne.s32.totalorder %s202, %s205
      %p214 = scmp.eq.s32.totalorder %s24, 2
      %p215 = por %p213, %p214
      %p216 = scmp.ne.s32.totalorder %s205, %s206
      %p217 = scmp.eq.s32.totalorder %s24, 0
      %p218 = por %p216, %p217
      %p219 = scmp.ne.s32.totalorder %s205, %s206
      %p220 = scmp.eq.s32.totalorder %s25, 2
      %p221 = por %p219, %p220
      %p223 = scmp.ne.s32.totalorder %s206, %s222
      %p224 = scmp.eq.s32.totalorder %s25, 0
      %p225 = por %p223, %p224
      %p226 = scmp.le.s32.totalorder 1, %s19
      %p227 = scmp.lt.s32.totalorder %s19, 4
      %p228 = pnand %p226, %p227
      %p229 = pneg %p228
      // Predicated region
      $region9: #{tpu_custom_call.1} parent=5 // pred_check
        _
      $region10: #{tpu_custom_call.1} parent=5 // pred_check_branch
        %231 = sbr.rel (%p228) target = $region12
      $region11: #{tpu_custom_call.1} parent=5 // pred_region
        %s232 = ssub.s32 %s19, 1
        // Predicated region
        $region13: #{tpu_custom_call.1} parent=11 // pred_check
          %p233 = pneg %p66
        $region14: #{tpu_custom_call.1} parent=11 // pred_check_branch
          %235 = sbr.rel (%p233) target = $region16
        $region15: #{tpu_custom_call.1} parent=11 // pred_region
          _
        $region16: #{tpu_custom_call.1} parent=11 // pred_fallthru
          _
        // Predicated region
        $region17: #{tpu_custom_call.1} parent=11 // pred_check
          %p236 = pneg %p87
        $region18: #{tpu_custom_call.1} parent=11 // pred_check_branch
          %238 = sbr.rel (%p236) target = $region20
        $region19: #{tpu_custom_call.1} parent=11 // pred_region
          _
        $region20: #{tpu_custom_call.1} parent=11 // pred_fallthru
          _
        // Predicated region
        $region21: #{tpu_custom_call.1} parent=11 // pred_check
          %p239 = pneg %p108
        $region22: #{tpu_custom_call.1} parent=11 // pred_check_branch
          %241 = sbr.rel (%p239) target = $region24
        $region23: #{tpu_custom_call.1} parent=11 // pred_region
          _
        $region24: #{tpu_custom_call.1} parent=11 // pred_fallthru
          _
        // Predicated region
        $region25: #{tpu_custom_call.1} parent=11 // pred_check
          %p242 = pneg %p129
        $region26: #{tpu_custom_call.1} parent=11 // pred_check_branch
          %244 = sbr.rel (%p242) target = $region28
        $region27: #{tpu_custom_call.1} parent=11 // pred_region
          _
        $region28: #{tpu_custom_call.1} parent=11 // pred_fallthru
          _
        // Predicated region
        $region29: #{tpu_custom_call.1} parent=11 // pred_check
          %p245 = pneg %p150
        $region30: #{tpu_custom_call.1} parent=11 // pred_check_branch
          %247 = sbr.rel (%p245) target = $region32
        $region31: #{tpu_custom_call.1} parent=11 // pred_region
          _
        $region32: #{tpu_custom_call.1} parent=11 // pred_fallthru
          _
        // Predicated region
        $region33: #{tpu_custom_call.1} parent=11 // pred_check
          %p248 = pneg %p171
        $region34: #{tpu_custom_call.1} parent=11 // pred_check_branch
          %250 = sbr.rel (%p248) target = $region36
        $region35: #{tpu_custom_call.1} parent=11 // pred_region
          _
        $region36: #{tpu_custom_call.1} parent=11 // pred_fallthru
          _
        // Predicated region
        $region37: #{tpu_custom_call.1} parent=11 // pred_check
          %p251 = pneg %p192
        $region38: #{tpu_custom_call.1} parent=11 // pred_check_branch
          %253 = sbr.rel (%p251) target = $region40
        $region39: #{tpu_custom_call.1} parent=11 // pred_region
          _
        $region40: #{tpu_custom_call.1} parent=11 // pred_fallthru
          _
      $region12: #{tpu_custom_call.1} parent=5 // pred_fallthru
        _
      %p254 = scmp.lt.s32.totalorder %s19, 3
      // Predicated region
      $region41: #{tpu_custom_call.1} parent=5 // pred_check
        %p255 = pneg %p254
      $region42: #{tpu_custom_call.1} parent=5 // pred_check_branch
        %257 = sbr.rel (%p255) target = $region44
      $region43: #{tpu_custom_call.1} parent=5 // pred_region
        // Predicated region
        $region45: #{tpu_custom_call.1} parent=43 // pred_check
          %p258 = pneg %p39
        $region46: #{tpu_custom_call.1} parent=43 // pred_check_branch
          %260 = sbr.rel (%p258) target = $region48
        $region47: #{tpu_custom_call.1} parent=43 // pred_region
          %p261 = scmp.lt.s32.totalorder %s19, 2
          %s262 = scalar_select %p261, %s19, 2
          %s263 = smul.addr %s262, 8
          %s264 = scalar_lea.vmem %s0, %s263
        $region48: #{tpu_custom_call.1} parent=43 // pred_fallthru
          _
      $region44: #{tpu_custom_call.1} parent=5 // pred_fallthru
        _
      %p265 = scmp.le.s32.totalorder 1, %s19
      %p266 = scmp.lt.s32.totalorder %s19, 4
      %p267 = pnand %p265, %p266
      %p268 = pneg %p267
      // Predicated region
      $region49: #{tpu_custom_call.1} parent=5 // pred_check
        _
      $region50: #{tpu_custom_call.1} parent=5 // pred_check_branch
        %270 = sbr.rel (%p267) target = $region52
      $region51: #{tpu_custom_call.1} parent=5 // pred_region
        %s271 = ssub.s32 %s19, 1
        %p272 = scmp.lt.s32.totalorder %s24, 2
        %s273 = scalar_select %p272, %s24, 2
        %s274 = smul.addr %s273, 8
        %s275 = scalar_lea.vmem %s0, %s274
        %p276 = pneg %p45
        %p277 = pneg %p42
        %p278 = pneg %p66
        %p279 = pneg %p63
        %p280 = pneg %p87
        %p281 = pneg %p84
        %p282 = pneg %p108
        %p283 = pneg %p105
        %p284 = pneg %p129
        %p285 = pneg %p126
        %p286 = pneg %p150
        %p287 = pneg %p147
        %p288 = pneg %p171
        %p289 = pneg %p168
        %p290 = pneg %p192
        %p291 = pneg %p189
        %p292 = pneg %p218
        %p293 = pneg %p215
        %s294 = sand.u32 %s205, 1
        %s295 = scalar_lea.sflag [#allocation4], %s294
        %s296 = sand.u32 %s205, 1
        %s297 = smul.addr %s296, 2
        %s298 = scalar_lea.vmem [#allocation3], %s297
        %p299 = scmp.lt.s32.totalorder %s24, 2
        %s300 = scalar_select %p299, %s24, 2
        %s301 = smul.addr %s300, 8
        %s302 = scalar_lea.vmem %s0, %s301
        %v303 = vld [vmem:[%s302] sm:$0x1]
        %v304 = vld [vmem:[%s3] sm:$0xf]
        %v305 = vlaneseq
        %v306 = vshrl.u32 %v305, 7
        %v307 = vsub.s32 0, %v306
        %v308 = vrot.slane %v303, %v307
        %310 = vset.pattern.permute.xlu0 0
        %311 = vperm.xlu0 %310, %v304
        %v312 = vpop.permute.xlu0 %311
        %v314 = vsub.f32 %v308, %v312
        %v315 = vld [vmem:[%s1] sm:$0xf]
        %317 = vset.pattern.permute.xlu0 0
        %318 = vperm.xlu0 %317, %v315
        %v319 = vpop.permute.xlu0 %318
        %v321 = vmul.f32 %v314, %v319
        %v322 = vand.u32 2147483647, %v321
        %v323 = vld [vmem:[%s302 + $0x1] sm:$0x1]
        %s324 = scalar_lea.vmem %s3, 4
        %v325 = vld [vmem:[%s324] sm:$0xf]
        %v326 = vlaneseq
        %v327 = vshrl.u32 %v326, 7
        %v328 = vsub.s32 0, %v327
        %v329 = vrot.slane %v323, %v328
        %331 = vset.pattern.permute.xlu0 0
        %332 = vperm.xlu0 %331, %v325
        %v333 = vpop.permute.xlu0 %332
        %v335 = vsub.f32 %v329, %v333
        %s336 = scalar_lea.vmem %s1, 4
        %v337 = vld [vmem:[%s336] sm:$0xf]
        %339 = vset.pattern.permute.xlu0 0
        %340 = vperm.xlu0 %339, %v337
        %v341 = vpop.permute.xlu0 %340
        %v343 = vmul.f32 %v335, %v341
        %v344 = vand.u32 2147483647, %v343
        %v345 = vld [vmem:[%s302 + $0x2] sm:$0x1]
        %s346 = scalar_lea.vmem %s3, 8
        %v347 = vld [vmem:[%s346] sm:$0xf]
        %v348 = vlaneseq
        %v349 = vshrl.u32 %v348, 7
        %v350 = vsub.s32 0, %v349
        %v351 = vrot.slane %v345, %v350
        %353 = vset.pattern.permute.xlu0 0
        %354 = vperm.xlu0 %353, %v347
        %v355 = vpop.permute.xlu0 %354
        %v357 = vsub.f32 %v351, %v355
        %s358 = scalar_lea.vmem %s1, 8
        %v359 = vld [vmem:[%s358] sm:$0xf]
        %361 = vset.pattern.permute.xlu0 0
        %362 = vperm.xlu0 %361, %v359
        %v363 = vpop.permute.xlu0 %362
        %v365 = vmul.f32 %v357, %v363
        %v366 = vand.u32 2147483647, %v365
        %v367 = vld [vmem:[%s302 + $0x3] sm:$0x1]
        %s368 = scalar_lea.vmem %s3, 12
        %v369 = vld [vmem:[%s368] sm:$0xf]
        %v370 = vlaneseq
        %v371 = vshrl.u32 %v370, 7
        %v372 = vsub.s32 0, %v371
        %v373 = vrot.slane %v367, %v372
        %375 = vset.pattern.permute.xlu0 0
        %376 = vperm.xlu0 %375, %v369
        %v377 = vpop.permute.xlu0 %376
        %v379 = vsub.f32 %v373, %v377
        %s380 = scalar_lea.vmem %s1, 12
        %v381 = vld [vmem:[%s380] sm:$0xf]
        %383 = vset.pattern.permute.xlu0 0
        %384 = vperm.xlu0 %383, %v381
        %v385 = vpop.permute.xlu0 %384
        %v387 = vmul.f32 %v379, %v385
        %v388 = vand.u32 2147483647, %v387
        %v389 = vld [vmem:[%s302 + $0x4] sm:$0x1]
        %s390 = scalar_lea.vmem %s3, 16
        %v391 = vld [vmem:[%s390] sm:$0xf]
        %v392 = vlaneseq
        %v393 = vshrl.u32 %v392, 7
        %v394 = vsub.s32 0, %v393
        %v395 = vrot.slane %v389, %v394
        %397 = vset.pattern.permute.xlu0 0
        %398 = vperm.xlu0 %397, %v391
        %v399 = vpop.permute.xlu0 %398
        %v401 = vsub.f32 %v395, %v399
        %s402 = scalar_lea.vmem %s1, 16
        %v403 = vld [vmem:[%s402] sm:$0xf]
        %405 = vset.pattern.permute.xlu0 0
        %406 = vperm.xlu0 %405, %v403
        %v407 = vpop.permute.xlu0 %406
        %v409 = vmul.f32 %v401, %v407
        %v410 = vand.u32 2147483647, %v409
        %v411 = vld [vmem:[%s302 + $0x5] sm:$0x1]
        %s412 = scalar_lea.vmem %s3, 20
        %v413 = vld [vmem:[%s412] sm:$0xf]
        %v414 = vlaneseq
        %v415 = vshrl.u32 %v414, 7
        %v416 = vsub.s32 0, %v415
        %v417 = vrot.slane %v411, %v416
        %419 = vset.pattern.permute.xlu0 0
        %420 = vperm.xlu0 %419, %v413
        %v421 = vpop.permute.xlu0 %420
        %v423 = vsub.f32 %v417, %v421
        %s424 = scalar_lea.vmem %s1, 20
        %v425 = vld [vmem:[%s424] sm:$0xf]
        %427 = vset.pattern.permute.xlu0 0
        %428 = vperm.xlu0 %427, %v425
        %v429 = vpop.permute.xlu0 %428
        %v431 = vmul.f32 %v423, %v429
        %v432 = vand.u32 2147483647, %v431
        %v433 = vld [vmem:[%s302 + $0x6] sm:$0x1]
        %s434 = scalar_lea.vmem %s3, 24
        %v435 = vld [vmem:[%s434] sm:$0xf]
        %v436 = vlaneseq
        %v437 = vshrl.u32 %v436, 7
        %v438 = vsub.s32 0, %v437
        %v439 = vrot.slane %v433, %v438
        %441 = vset.pattern.permute.xlu0 0
        %442 = vperm.xlu0 %441, %v435
        %v443 = vpop.permute.xlu0 %442
        %v445 = vsub.f32 %v439, %v443
        %s446 = scalar_lea.vmem %s1, 24
        %v447 = vld [vmem:[%s446] sm:$0xf]
        %449 = vset.pattern.permute.xlu0 0
        %450 = vperm.xlu0 %449, %v447
        %v451 = vpop.permute.xlu0 %450
        %v453 = vmul.f32 %v445, %v451
        %v454 = vand.u32 2147483647, %v453
        %v455 = vld [vmem:[%s302 + $0x7] sm:$0x1]
        %s456 = scalar_lea.vmem %s3, 28
        %v457 = vld [vmem:[%s456] sm:$0xf]
        %v458 = vlaneseq
        %v459 = vshrl.u32 %v458, 7
        %v460 = vsub.s32 0, %v459
        %v461 = vrot.slane %v455, %v460
        %463 = vset.pattern.permute.xlu0 0
        %464 = vperm.xlu0 %463, %v457
        %v465 = vpop.permute.xlu0 %464
        %v467 = vsub.f32 %v461, %v465
        %s468 = scalar_lea.vmem %s1, 28
        %v469 = vld [vmem:[%s468] sm:$0xf]
        %471 = vset.pattern.permute.xlu0 0
        %472 = vperm.xlu0 %471, %v469
        %v473 = vpop.permute.xlu0 %472
        %v475 = vmul.f32 %v467, %v473
        %v476 = vand.u32 2147483647, %v475
        %v478 = vrot.slane %v344, 4
        %v481 = vrot.slane %v388, 4
        %v484 = vrot.slane %v432, 4
        %v487 = vrot.slane %v476, 4
        %vm489 = vcmask 1043456
        %v490 = vsel %vm489, %v322, %v478
        %v491 = vsel %vm489, %v366, %v481
        %v492 = vsel %vm489, %v410, %v484
        %v493 = vsel %vm489, %v454, %v487
        %v494 = vmax.f32 %v490, 1e-30
        %v495 = vmax.f32 %v491, 1e-30
        %v496 = vmax.f32 %v492, 1e-30
        %v497 = vmax.f32 %v493, 1e-30
        %v498 = vld [vmem:[%s2] sm:$0xff]
        %v499 = vld [vmem:[%s2 + $0x8] sm:$0xff]
        %v500 = vld [vmem:[%s2 + $0x10] sm:$0xff]
        %v501 = vld [vmem:[%s2 + $0x18] sm:$0xff]
        %v502 = vlog2.pop %v494
        %v503 = vmul.f32 %v502, 0.6931472
        %v504 = vlog2.pop %v495
        %v505 = vmul.f32 %v504, 0.6931472
        %v506 = vlog2.pop %v496
        %v507 = vmul.f32 %v506, 0.6931472
        %v508 = vlog2.pop %v497
        %v509 = vmul.f32 %v508, 0.6931472
        %511 = vset.pattern.permute.xlu0 0
        %512 = vperm.xlu0 %511, %v498
        %v513 = vpop.permute.xlu0 %512
        %516 = vset.pattern.permute.xlu0 0
        %517 = vperm.xlu0 %516, %v499
        %v518 = vpop.permute.xlu0 %517
        %521 = vset.pattern.permute.xlu0 0
        %522 = vperm.xlu0 %521, %v500
        %v523 = vpop.permute.xlu0 %522
        %526 = vset.pattern.permute.xlu0 0
        %527 = vperm.xlu0 %526, %v501
        %v528 = vpop.permute.xlu0 %527
        %v530 = vmul.f32 %v513, %v503
        %v531 = vmul.f32 %v518, %v505
        %v532 = vmul.f32 %v523, %v507
        %v533 = vmul.f32 %v528, %v509
        %v534 = vtanh.pop %v530
        %v535 = vtanh.pop %v531
        %v536 = vtanh.pop %v532
        %v537 = vtanh.pop %v533
        %v538 = vadd.f32 %v534, 1.0
        %v539 = vadd.f32 %v535, 1.0
        %v540 = vadd.f32 %v536, 1.0
        %v541 = vadd.f32 %v537, 1.0
        %v542 = vmul.f32 %v538, 0.5
        %v543 = vmul.f32 %v539, 0.5
        %v544 = vmul.f32 %v540, 0.5
        %v545 = vmul.f32 %v541, 0.5
        %v546 = vld [vmem:[%s4] sm:$0xff]
        %v547 = vld [vmem:[%s4 + $0x8] sm:$0xff]
        %v548 = vld [vmem:[%s5] sm:$0xff]
        %v549 = vld [vmem:[%s5 + $0x8] sm:$0xff]
        %v550 = vld [vmem:[%s6] sm:$0xff]
        %v551 = vld [vmem:[%s6 + $0x8] sm:$0xff]
        %v552 = vld [vmem:[#allocation2] sm:$0x1]
        %554 = vset.pattern.permute.xlu0 0
        %555 = vperm.xlu0 %554, %v548
        %v556 = vpop.permute.xlu0 %555
        %559 = vset.pattern.permute.xlu0 0
        %560 = vperm.xlu0 %559, %v549
        %v561 = vpop.permute.xlu0 %560
        %vm563 = vcmask 130048
        %v565 = vsel %vm563, %v546, 0
        %v568 = vsel %vm563, %v547, 0
        %570 = vmatprep.subr.mxu0 0.0
        %571 = vmatpush1.msra.mxu0 0.0
        %572 = vmatprep.subr.mxu0 0.0
        %573 = vmatpush1.msra.mxu0 0.0
        %574 = vmatprep.subr.mxu0 0.0
        %575 = vmatpush1.msra.mxu0 0.0
        %576 = vmatprep.subr.mxu0 0.0
        %577 = vmatpush1.msra.mxu0 0.0
        %578 = vmatprep.subr.mxu0 0.0
        %579 = vmatpush1.msra.mxu0 0.0
        %580 = vmatprep.subr.mxu0 0.0
        %581 = vmatpush1.msra.mxu0 0.0
        %582 = vmatprep.subr.mxu0 0.0
        %583 = vmatpush1.msra.mxu0 0.0
        %584 = vmatprep.subr.mxu0 0.0
        %585 = vmatpush1.msra.mxu0 0.0
        %586 = vmatprep.subr.mxu0 0.0
        %587 = vmatpush1.msra.mxu0 0.0
        %588 = vmatprep.subr.mxu0 0.0
        %589 = vmatpush1.msra.mxu0 0.0
        %590 = vmatprep.subr.mxu0 0.0
        %591 = vmatpush1.msra.mxu0 0.0
        %592 = vmatprep.subr.mxu0 0.0
        %593 = vmatpush1.msra.mxu0 0.0
        %594 = vmatprep.subr.mxu0 0.0
        %595 = vmatpush1.msra.mxu0 0.0
        %596 = vmatprep.subr.mxu0 0.0
        %597 = vmatpush1.msra.mxu0 0.0
        %598 = vmatprep.subr.mxu0 0.0
        %599 = vmatpush1.msra.mxu0 %v543
        %600 = vmatprep.subr.mxu0 0.0
        %601 = vmatpush1.msra.mxu0 %v542
        %602 = vmatprep.subr.mxu0 0.0
        %603 = vmatpush2.msra.mxu0 0.0
        %604 = vmatprep.subr.mxu0 0.0
        %605 = vmatpush2.msra.mxu0 0.0
        %606 = vmatprep.subr.mxu0 0.0
        %607 = vmatpush2.msra.mxu0 0.0
        %608 = vmatprep.subr.mxu0 0.0
        %609 = vmatpush2.msra.mxu0 0.0
        %610 = vmatprep.subr.mxu0 0.0
        %611 = vmatpush2.msra.mxu0 0.0
        %612 = vmatprep.subr.mxu0 0.0
        %613 = vmatpush2.msra.mxu0 0.0
        %614 = vmatprep.subr.mxu0 0.0
        %615 = vmatpush2.msra.mxu0 0.0
        %616 = vmatprep.subr.mxu0 0.0
        %617 = vmatpush2.msra.mxu0 0.0
        %618 = vmatprep.subr.mxu0 0.0
        %619 = vmatpush2.msra.mxu0 0.0
        %620 = vmatprep.subr.mxu0 0.0
        %621 = vmatpush2.msra.mxu0 0.0
        %622 = vmatprep.subr.mxu0 0.0
        %623 = vmatpush2.msra.mxu0 0.0
        %624 = vmatprep.subr.mxu0 0.0
        %625 = vmatpush2.msra.mxu0 0.0
        %626 = vmatprep.subr.mxu0 0.0
        %627 = vmatpush2.msra.mxu0 0.0
        %628 = vmatprep.subr.mxu0 0.0
        %629 = vmatpush2.msra.mxu0 0.0
        %630 = vmatprep.subr.mxu0 0.0
        %631 = vmatpush2.msra.mxu0 0.0
        %632 = vmatprep.subr.mxu0 0.0
        %633 = vmatpush2.msra.mxu0 0.0
        %634 = vmatprep.mubr.f32.mxu0 0.0
        %635 = vmatmul.mubr.f32.gmra.mxu0 %v565
        %v636 = vpop.f32.mrf.mxu0
        %v637 = vadd.f32 %v556, %v636
        %v638 = vpop.f32.mrf.mxu0
        %639 = vmatprep.mubr.f32.mxu0 0.0
        %640 = vmatmul.mubr.f32.gmra.mxu0 %v568
        %v641 = vpop.f32.mrf.mxu0
        %v642 = vadd.f32 %v561, %v641
        %v643 = vpop.f32.mrf.mxu0
        %644 = vdwg.mxu0
        %v645 = vmax.f32 %v637, 0.0
        %v646 = vmax.f32 %v642, 0.0
        %648 = vset.pattern.permute.xlu0 0
        %649 = vperm.xlu0 %648, %v550
        %v650 = vpop.permute.xlu0 %649
        %653 = vset.pattern.permute.xlu0 0
        %654 = vperm.xlu0 %653, %v551
        %v655 = vpop.permute.xlu0 %654
        %v657 = vmul.f32 %v645, %v650
        %v658 = vmul.f32 %v646, %v655
        %v659 = vadd.f32 %v657, %v658
        %v660 = vrot.slane %v659, 4
        %v661 = vadd.f32 %v659, %v660
        %v662 = vrot.slane %v661, 2
        %v663 = vadd.f32 %v661, %v662
        %v664 = vrot.slane %v663, 1
        %v665 = vadd.f32 %v663, %v664
        %667 = vset.pattern.permute.xlu0 0
        %668 = vperm.xlu0 %667, %v552
        %v669 = vpop.permute.xlu0 %668
        %v671 = vlaneseq
        %v672 = vshrl.u32 %v671, 7
        %v673 = vsub.s32 0, %v672
        %v674 = vrot.slane %v669, %v673
        %v675 = vadd.f32 %v665, %v674
        %676 = vmatprep.subr.mxu0 0.0
        %677 = vmatpush1.msra.mxu0 0.0
        %678 = vmatprep.subr.mxu0 0.0
        %679 = vmatpush1.msra.mxu0 0.0
        %680 = vmatprep.subr.mxu0 0.0
        %681 = vmatpush1.msra.mxu0 0.0
        %682 = vmatprep.subr.mxu0 0.0
        %683 = vmatpush1.msra.mxu0 0.0
        %684 = vmatprep.subr.mxu0 0.0
        %685 = vmatpush1.msra.mxu0 0.0
        %686 = vmatprep.subr.mxu0 0.0
        %687 = vmatpush1.msra.mxu0 0.0
        %688 = vmatprep.subr.mxu0 0.0
        %689 = vmatpush1.msra.mxu0 0.0
        %690 = vmatprep.subr.mxu0 0.0
        %691 = vmatpush1.msra.mxu0 0.0
        %692 = vmatprep.subr.mxu0 0.0
        %693 = vmatpush1.msra.mxu0 0.0
        %694 = vmatprep.subr.mxu0 0.0
        %695 = vmatpush1.msra.mxu0 0.0
        %696 = vmatprep.subr.mxu0 0.0
        %697 = vmatpush1.msra.mxu0 0.0
        %698 = vmatprep.subr.mxu0 0.0
        %699 = vmatpush1.msra.mxu0 0.0
        %700 = vmatprep.subr.mxu0 0.0
        %701 = vmatpush1.msra.mxu0 0.0
        %702 = vmatprep.subr.mxu0 0.0
        %703 = vmatpush1.msra.mxu0 0.0
        %704 = vmatprep.subr.mxu0 0.0
        %705 = vmatpush1.msra.mxu0 %v545
        %706 = vmatprep.subr.mxu0 0.0
        %707 = vmatpush1.msra.mxu0 %v544
        %708 = vmatprep.subr.mxu0 0.0
        %709 = vmatpush2.msra.mxu0 0.0
        %710 = vmatprep.subr.mxu0 0.0
        %711 = vmatpush2.msra.mxu0 0.0
        %712 = vmatprep.subr.mxu0 0.0
        %713 = vmatpush2.msra.mxu0 0.0
        %714 = vmatprep.subr.mxu0 0.0
        %715 = vmatpush2.msra.mxu0 0.0
        %716 = vmatprep.subr.mxu0 0.0
        %717 = vmatpush2.msra.mxu0 0.0
        %718 = vmatprep.subr.mxu0 0.0
        %719 = vmatpush2.msra.mxu0 0.0
        %720 = vmatprep.subr.mxu0 0.0
        %721 = vmatpush2.msra.mxu0 0.0
        %722 = vmatprep.subr.mxu0 0.0
        %723 = vmatpush2.msra.mxu0 0.0
        %724 = vmatprep.subr.mxu0 0.0
        %725 = vmatpush2.msra.mxu0 0.0
        %726 = vmatprep.subr.mxu0 0.0
        %727 = vmatpush2.msra.mxu0 0.0
        %728 = vmatprep.subr.mxu0 0.0
        %729 = vmatpush2.msra.mxu0 0.0
        %730 = vmatprep.subr.mxu0 0.0
        %731 = vmatpush2.msra.mxu0 0.0
        %732 = vmatprep.subr.mxu0 0.0
        %733 = vmatpush2.msra.mxu0 0.0
        %734 = vmatprep.subr.mxu0 0.0
        %735 = vmatpush2.msra.mxu0 0.0
        %736 = vmatprep.subr.mxu0 0.0
        %737 = vmatpush2.msra.mxu0 0.0
        %738 = vmatprep.subr.mxu0 0.0
        %739 = vmatpush2.msra.mxu0 0.0
        %740 = vmatprep.mubr.f32.mxu0 0.0
        %741 = vmatmul.mubr.f32.gmra.mxu0 %v565
        %v742 = vpop.f32.mrf.mxu0
        %v743 = vadd.f32 %v556, %v742
        %v744 = vpop.f32.mrf.mxu0
        %745 = vmatprep.mubr.f32.mxu0 0.0
        %746 = vmatmul.mubr.f32.gmra.mxu0 %v568
        %v747 = vpop.f32.mrf.mxu0
        %v748 = vadd.f32 %v561, %v747
        %v749 = vpop.f32.mrf.mxu0
        %750 = vdwg.mxu0
        %v751 = vmax.f32 %v743, 0.0
        %v752 = vmax.f32 %v748, 0.0
        %v753 = vmul.f32 %v751, %v650
        %v754 = vmul.f32 %v752, %v655
        %v755 = vadd.f32 %v753, %v754
        %v756 = vrot.slane %v755, 4
        %v757 = vadd.f32 %v755, %v756
        %v758 = vrot.slane %v757, 2
        %v759 = vadd.f32 %v757, %v758
        %v760 = vrot.slane %v759, 1
        %v761 = vadd.f32 %v759, %v760
        %v762 = vadd.f32 %v761, %v674
        %vm763 = vcmask 1040384
        %v764 = vsel %vm763, %v675, %v762
        %765 = vst [vmem:[%s298] sm:$0x3] %v764
        %s766 = sand.u32 %s205, 1
        %s767 = scalar_lea.sflag [#allocation4], %s766
        %s768 = sand.u32 %s205, 1
        %s769 = smul.addr %s768, 2
        %s770 = scalar_lea.vmem [#allocation3], %s769
        // Predicated region
        $region53: #{tpu_custom_call.1} parent=51 // pred_check
          %p771 = pneg %p215
        $region54: #{tpu_custom_call.1} parent=51 // pred_check_branch
          %773 = sbr.rel (%p771) target = $region56
        $region55: #{tpu_custom_call.1} parent=51 // pred_region
          %s775 = ssub.s32 32, 32
          %776 = vsyncadd %s767, %s775
          %s777 = smul.addr %s24, 32
          %s778 = scalar_lea.hbm %s8, %s777
          %s780 = sshll.u32 %s770, 4
          %s781 = int_to_ptr.vmem [resolvable:$true] %s780
          %783 = dma.vmem_to_hbm [thread:$0]  %s781, 32, %s778, %s767
        $region56: #{tpu_custom_call.1} parent=51 // pred_fallthru
          _
      $region52: #{tpu_custom_call.1} parent=5 // pred_fallthru
        _
      %p784 = scmp.le.s32.totalorder 2, %s19
      // Predicated region
      $region57: #{tpu_custom_call.1} parent=5 // pred_check
        %p785 = pneg %p784
      $region58: #{tpu_custom_call.1} parent=5 // pred_check_branch
        %787 = sbr.rel (%p785) target = $region60
      $region59: #{tpu_custom_call.1} parent=5 // pred_region
        %s788 = ssub.s32 %s19, 2
        // Predicated region
        $region61: #{tpu_custom_call.1} parent=59 // pred_check
          %p789 = pneg %p221
        $region62: #{tpu_custom_call.1} parent=59 // pred_check_branch
          %791 = sbr.rel (%p789) target = $region64
        $region63: #{tpu_custom_call.1} parent=59 // pred_region
          %s792 = sand.u32 %s206, 1
          %s793 = scalar_lea.sflag [#allocation4], %s792
          %s794 = sand.u32 %s206, 1
          %s795 = smul.addr %s794, 2
          %s796 = scalar_lea.vmem [#allocation3], %s795
          %797 = dma.done %s793, 32
        $region64: #{tpu_custom_call.1} parent=59 // pred_fallthru
          _
      $region60: #{tpu_custom_call.1} parent=5 // pred_fallthru
        _
    $region6: #{tpu_custom_call.1} parent=1 // loop_footer
      %s23 = sadd.s32 1, %s19
    $region7: #{tpu_custom_call.1} parent=1 // loop_footer_branch
      %18 = sbr.rel target = $region3
    $region8: #{tpu_custom_call.1} parent=1 // loop_exit
      _
    %798 = vsyncpa [#allocation4], 1
    %s799 = scalar_lea.sflag [#allocation4], 1
    %800 = vsyncpa %s799, 1

</llo_original>
